<compile_context>
chip_gen: v7x
topology: tpu7x:2x2x1
jax: 0.10.0
libtpu: 0.0.40
codegen_flags: <defaults>
</compile_context>

<pallas_src>
import functools

import jax
import jax.numpy as jnp
from jax.experimental import pallas as pl
from jax.experimental.pallas import tpu as pltpu


def _round_up(x, m):
    return (x + m - 1) // m * m


def _bce_dice_partial_kernel(yp_ref, yt_ref, out_ref, *, channels, tile_rows,
                             tile_lanes, true_rows, true_lanes,
                             binary_targets, bf16_logs):
    yp = yp_ref[...].astype(jnp.float32)
    yt = yt_ref[...].astype(jnp.float32)

    row_base = pl.program_id(0) * tile_rows
    col_base = pl.program_id(1) * tile_lanes

    # ---- Ragged-edge masking (replaces the old XLA-side jnp.pad) ----------
    # With a cdiv() grid, the last tile along each axis may overhang the true
    # array extent; those positions hold unspecified VMEM data and must be
    # neutralized before any log / sum. Interior tiles pay only cheap VPU ops.
    needs_mask = (true_rows % tile_rows != 0) or (true_lanes % tile_lanes != 0)
    if needs_mask:
        row_in = (row_base + jax.lax.broadcasted_iota(
            jnp.int32, (tile_rows, 1), 0)) < true_rows
        col_in = (col_base + jax.lax.broadcasted_iota(
            jnp.int32, (1, tile_lanes), 1)) < true_lanes
        mask = row_in & col_in                        # (TR, TL) bool
        maskf = mask.astype(jnp.float32)
        yp_bce = jnp.where(mask, yp, 0.5)             # finite logs in the pad
        yt = jnp.where(mask, yt, 0.0)                 # pad contributes 0
        yp_dice = yp_bce * maskf                      # pad contributes 0
        ones = maskf
    else:
        yp_bce = yp
        yp_dice = yp
        ones = 1.0

    def log_clamped(p):
        # PyTorch BCELoss clamps each log term at -100.
        if bf16_logs:
            # Opt-in, v6e/v7x only: bf16 EUP packs sublanes (~2x log rate).
            return jnp.maximum(
                jnp.log(p.astype(jnp.bfloat16)).astype(jnp.float32), -100.0)
        return jnp.maximum(jnp.log(p), -100.0)

    # ---- BCE partial sum ----------------------------------------------------
    if binary_targets:
        # One transcendental / element; exact only for strictly {0,1} targets.
        p_eff = jnp.where(yt > 0.5, yp_bce, 1.0 - yp_bce)
        term = log_clamped(p_eff)
        bce_elem = -(term * ones) if needs_mask else -term
    else:
        bce_elem = -(yt * log_clamped(yp_bce)
                     + (ones - yt) * log_clamped(1.0 - yp_bce))
    # Row-first reduction keeps the accumulation tree-like for large tiles.
    bce_sum = jnp.sum(jnp.sum(bce_elem, axis=-1, keepdims=True))

    # ---- Dice partial sums over channel-0 rows (row % C == 0) ---------------
    row_sum_pt = jnp.sum(yp_dice * yt, axis=-1, keepdims=True)   # (TR, 1)
    row_sum_p = jnp.sum(yp_dice, axis=-1, keepdims=True)         # (TR, 1)
    row_sum_t = jnp.sum(yt, axis=-1, keepdims=True)              # (TR, 1)

    row_ids = row_base + jax.lax.broadcasted_iota(jnp.int32, (tile_rows, 1), 0)
    ch0 = (row_ids % channels) == 0
    inter = jnp.sum(jnp.where(ch0, row_sum_pt, 0.0))
    sum_p0 = jnp.sum(jnp.where(ch0, row_sum_p, 0.0))
    sum_t0 = jnp.sum(jnp.where(ch0, row_sum_t, 0.0))

    # Lane-dense (8, 128) partials tile: lanes 0..3 carry the four sums.
    lane = jax.lax.broadcasted_iota(jnp.int32, (8, 128), 1)
    tile = jnp.zeros((8, 128), jnp.float32)
    tile = jnp.where(lane == 0, bce_sum, tile)
    tile = jnp.where(lane == 1, inter, tile)
    tile = jnp.where(lane == 2, sum_p0, tile)
    tile = jnp.where(lane == 3, sum_t0, tile)
    out_ref[0, 0] = tile


def _pick_defaults():
    """Per-generation (tile_bytes, vmem_limit_bytes)."""
    kind = ""
    try:
        kind = jax.devices()[0].device_kind.lower()
    except Exception:
        pass
    if any(tag in kind for tag in ("v4", "v5", "v6", "trillium")):
        # 128 MiB physical VMEM: big tiles amortize the ~0.35 us/step overhead.
        return 4 << 20, 64 << 20
    # v7x (64 MiB VMEM per TensorCore) and unknown chips: stay conservative.
    return 2 << 20, 32 << 20


def bce_dice_loss(y_pred, y_true, *, binary_targets=False, bf16_logs=False,
                  max_tile_bytes=None, vmem_limit_bytes=None):
    """y_pred, y_true: (N, C, H, W); y_pred must already be probabilities
    (same contract as nn.BCELoss + DiceLoss(sigmoid_required=False)).

    Inputs may be passed as bf16 to halve HBM traffic; accumulation is f32.
    """
    assert y_pred.shape == y_true.shape
    N, C, H, W = y_pred.shape
    R, L = N * C, H * W
    total_elems = N * C * H * W
    smooth = 1.0

    dflt_tile, dflt_vmem = _pick_defaults()
    if max_tile_bytes is None:
        max_tile_bytes = dflt_tile
    if vmem_limit_bytes is None:
        vmem_limit_bytes = dflt_vmem

    yp2 = y_pred.reshape(R, L)
    yt2 = y_true.reshape(R, L)
    itemsize = jnp.dtype(y_pred.dtype).itemsize

    # Lane tile: multiple of 128, capped so huge spatial dims still tile.
    TL = min(_round_up(L, 128), 2048)
    # Row tile: multiple of 8, sized so the per-tile f32 working set stays near
    # max_tile_bytes (2 inputs x 2 pipeline buffers + elementwise temporaries
    # fit inside the scoped VMEM limit on every generation).
    tile_elems = max_tile_bytes // 4
    TR = max(8, min((tile_elems // TL) // 8 * 8, _round_up(R, 8)))

    # Feed both v7x TensorCores: make sure the parallel grid has >= 2 blocks.
    if pl.cdiv(R, TR) * pl.cdiv(L, TL) < 2:
        if L > 128:
            TL = _round_up(pl.cdiv(L, 2), 128)
        elif R > 8:
            TR = _round_up(pl.cdiv(R, 2), 8)

    grid = (pl.cdiv(R, TR), pl.cdiv(L, TL))

    kernel = functools.partial(
        _bce_dice_partial_kernel,
        channels=C, tile_rows=TR, tile_lanes=TL, true_rows=R, true_lanes=L,
        binary_targets=binary_targets, bf16_logs=bf16_logs)

    cost = pl.CostEstimate(
        flops=10 * total_elems,
        transcendentals=(1 if binary_targets else 2) * total_elems,
        bytes_accessed=2 * R * L * itemsize + grid[0] * grid[1] * 8 * 128 * 4)

    partials = pl.pallas_call(
        kernel,
        out_shape=jax.ShapeDtypeStruct((grid[0], grid[1], 8, 128), jnp.float32),
        grid=grid,
        in_specs=[
            pl.BlockSpec((TR, TL), lambda i, j: (i, j)),
            pl.BlockSpec((TR, TL), lambda i, j: (i, j)),
        ],
        out_specs=pl.BlockSpec((1, 1, 8, 128), lambda i, j: (i, j, 0, 0)),
        compiler_params=pltpu.CompilerParams(
            dimension_semantics=("parallel", "parallel"),
            vmem_limit_bytes=vmem_limit_bytes),
        cost_estimate=cost,
    )(yp2, yt2)

    # Tiny final combine in plain JAX (keeps the grid fully parallel).
    sums = jnp.sum(partials[:, :, 0, :], axis=(0, 1))    # (128,)
    bce_mean = sums[0] / jnp.float32(total_elems)
    dsc = (2.0 * sums[1] + smooth) / (sums[2] + sums[3] + smooth)
    return (bce_mean + (1.0 - dsc)) * 0.5


def _reference(y_pred, y_true):
    # Plain-JAX reference matching PyTorch semantics (sanity check only).
    yp = y_pred.astype(jnp.float32)
    yt = y_true.astype(jnp.float32)
    bce = -(yt * jnp.maximum(jnp.log(yp), -100.0)
            + (1.0 - yt) * jnp.maximum(jnp.log(1.0 - yp), -100.0))
    ce = jnp.mean(bce)
    p0 = yp[:, 0].reshape(-1)
    t0 = yt[:, 0].reshape(-1)
    inter = jnp.sum(p0 * t0)
    dsc = (2.0 * inter + 1.0) / (jnp.sum(p0) + jnp.sum(t0) + 1.0)
    return (ce + (1.0 - dsc)) / 2.0


if __name__ == "__main__":
    key = jax.random.PRNGKey(0)

    def make_inputs(shape, k):
        k1, k2 = jax.random.split(k)
        # y_pred must be probabilities for BCELoss -> sigmoid of random logits.
        y_pred = jax.nn.sigmoid(jax.random.normal(k1, shape, dtype=jnp.float32))
        y_true = (jax.random.uniform(k2, shape) > 0.5).astype(jnp.float32)
        return y_pred, y_true

    k_a, k_b, k_c = jax.random.split(key, 3)

    # Aligned case: N=2, C=4, H=W=16 (default exact-PyTorch soft-target path).
    yp_a, yt_a = make_inputs((2, 4, 16, 16), k_a)
    ref_a = _reference(yp_a, yt_a)
    loss_a = jax.block_until_ready(bce_dice_loss(yp_a, yt_a))
    assert jnp.allclose(loss_a, ref_a, rtol=1e-5, atol=1e-5), (loss_a, ref_a)

    # One-log EUP path (valid here because targets are strictly {0,1}).
    loss_bin = jax.block_until_ready(
        bce_dice_loss(yp_a, yt_a, binary_targets=True))
    assert jnp.allclose(loss_bin, ref_a, rtol=1e-5, atol=1e-5), (loss_bin, ref_a)

    # bf16 streaming halves HBM bytes; accumulation stays f32 in-kernel.
    loss_bf16 = jax.block_until_ready(
        bce_dice_loss(yp_a.astype(jnp.bfloat16), yt_a.astype(jnp.bfloat16)))
    assert jnp.allclose(loss_bf16, ref_a, rtol=3e-2, atol=3e-2), (loss_bf16, ref_a)

    # Ragged shapes exercise the in-kernel edge masking (no XLA-side padding).
    for shape, kk in (((2, 3, 10, 10), k_b), ((3, 5, 9, 50), k_c)):
        yp_r, yt_r = make_inputs(shape, kk)
        ref_r = _reference(yp_r, yt_r)
        loss_r = jax.block_until_ready(bce_dice_loss(yp_r, yt_r))
        assert jnp.allclose(loss_r, ref_r, rtol=1e-5, atol=1e-5), (
            shape, loss_r, ref_r)

    print("KERNEL_OK")
</pallas_src>

<mosaic_0001>
module attributes {stable_mosaic.version = 11 : i64} {
  func.func @_bce_dice_partial_kernel(%arg0: i32, %arg1: i32, %arg2: memref<8x128xf32, #tpu.memory_space<vmem>>, %arg3: memref<8x128xf32, #tpu.memory_space<vmem>>, %arg4: memref<1x1x8x128xf32, #tpu.memory_space<vmem>>) attributes {dimension_semantics = [#tpu.dimension_semantics<parallel>, #tpu.dimension_semantics<parallel>], iteration_bounds = array<i64: 1, 2>, scalar_prefetch = 0 : i64, scratch_operands = 0 : i64, tpu.core_type = #tpu.core_type<tc>, window_params = [{transform_indices = @transform_0, window_bounds = array<i64: 8, 128>}, {transform_indices = @transform_1, window_bounds = array<i64: 8, 128>}, {transform_indices = @transform_2, window_bounds = array<i64: 1, 1, 8, 128>}]} {
    %c0 = arith.constant 0 : index
    %c0_0 = arith.constant 0 : index
    %0 = vector.load %arg2[%c0, %c0_0] : memref<8x128xf32, #tpu.memory_space<vmem>>, vector<8x128xf32>
    %c0_1 = arith.constant 0 : index
    %c0_2 = arith.constant 0 : index
    %1 = vector.load %arg3[%c0_1, %c0_2] : memref<8x128xf32, #tpu.memory_space<vmem>>, vector<8x128xf32>
    %c8_i32 = arith.constant 8 : i32
    %2 = arith.muli %arg0, %c8_i32 : i32
    %3 = math.log %0 : vector<8x128xf32>
    %cst = arith.constant -1.000000e+02 : f32
    %4 = vector.broadcast %cst : f32 to vector<8x128xf32>
    %5 = arith.maximumf %3, %4 : vector<8x128xf32>
    %6 = arith.mulf %1, %5 : vector<8x128xf32>
    %cst_3 = arith.constant 1.000000e+00 : f32
    %7 = vector.broadcast %cst_3 : f32 to vector<8x128xf32>
    %8 = arith.subf %7, %1 : vector<8x128xf32>
    %cst_4 = arith.constant 1.000000e+00 : f32
    %9 = vector.broadcast %cst_4 : f32 to vector<8x128xf32>
    %10 = arith.subf %9, %0 : vector<8x128xf32>
    %11 = math.log %10 : vector<8x128xf32>
    %cst_5 = arith.constant -1.000000e+02 : f32
    %12 = vector.broadcast %cst_5 : f32 to vector<8x128xf32>
    %13 = arith.maximumf %11, %12 : vector<8x128xf32>
    %14 = arith.mulf %8, %13 : vector<8x128xf32>
    %15 = arith.addf %6, %14 : vector<8x128xf32>
    %cst_6 = arith.constant 0.000000e+00 : f32
    %16 = vector.broadcast %cst_6 : f32 to vector<8x128xf32>
    %17 = arith.subf %16, %15 : vector<8x128xf32>
    %cst_7 = arith.constant dense<0.000000e+00> : vector<8xf32>
    %18 = vector.multi_reduction <add>, %17, %cst_7 [1] : vector<8x128xf32> to vector<8xf32>
    %19 = vector.shape_cast %18 : vector<8xf32> to vector<8x1xf32>
    %20 = vector.shape_cast %19 : vector<8x1xf32> to vector<1x8x1xf32>
    %cst_8 = arith.constant dense<0.000000e+00> : vector<1xf32>
    %21 = vector.multi_reduction <add>, %20, %cst_8 [1, 2] : vector<1x8x1xf32> to vector<1xf32>
    %22 = vector.shape_cast %21 : vector<1xf32> to vector<1x1x1xf32>
    %23 = vector.extract %22[0, 0, 0] : f32 from vector<1x1x1xf32>
    %24 = arith.mulf %0, %1 : vector<8x128xf32>
    %cst_9 = arith.constant dense<0.000000e+00> : vector<8xf32>
    %25 = vector.multi_reduction <add>, %24, %cst_9 [1] : vector<8x128xf32> to vector<8xf32>
    %26 = vector.shape_cast %25 : vector<8xf32> to vector<8x1xf32>
    %cst_10 = arith.constant dense<0.000000e+00> : vector<8xf32>
    %27 = vector.multi_reduction <add>, %0, %cst_10 [1] : vector<8x128xf32> to vector<8xf32>
    %28 = vector.shape_cast %27 : vector<8xf32> to vector<8x1xf32>
    %cst_11 = arith.constant dense<0.000000e+00> : vector<8xf32>
    %29 = vector.multi_reduction <add>, %1, %cst_11 [1] : vector<8x128xf32> to vector<8xf32>
    %30 = vector.shape_cast %29 : vector<8xf32> to vector<8x1xf32>
    %31 = tpu.iota {dimensions = array<i32: 0>} : vector<8x1xi32>
    %32 = vector.broadcast %2 : i32 to vector<8x1xi32>
    %33 = arith.addi %32, %31 : vector<8x1xi32>
    %c4_i32 = arith.constant 4 : i32
    %c0_i32 = arith.constant 0 : i32
    %34 = arith.cmpi eq, %c4_i32, %c0_i32 : i32
    %c1_i32 = arith.constant 1 : i32
    %35 = arith.select %34, %c1_i32, %c4_i32 : i32
    %36 = vector.broadcast %35 : i32 to vector<8x1xi32>
    %37 = arith.remsi %33, %36 : vector<8x1xi32>
    %c0_i32_12 = arith.constant 0 : i32
    %38 = vector.broadcast %c0_i32_12 : i32 to vector<8x1xi32>
    %39 = arith.cmpi ne, %37, %38 : vector<8x1xi32>
    %c0_i32_13 = arith.constant 0 : i32
    %40 = vector.broadcast %c0_i32_13 : i32 to vector<8x1xi32>
    %41 = arith.cmpi slt, %37, %40 : vector<8x1xi32>
    %c0_i32_14 = arith.constant 0 : i32
    %42 = arith.cmpi slt, %35, %c0_i32_14 : i32
    %43 = vector.broadcast %42 : i1 to vector<8x1xi1>
    %44 = vector.broadcast %43 : vector<8x1xi1> to vector<8x1xi1>
    %45 = arith.xori %41, %44 : vector<8x1xi1>
    %46 = arith.andi %45, %39 : vector<8x1xi1>
    %47 = vector.broadcast %35 : i32 to vector<8x1xi32>
    %48 = arith.addi %37, %47 : vector<8x1xi32>
    %49 = arith.select %46, %48, %37 : vector<8x1xi1>, vector<8x1xi32>
    %c0_i32_15 = arith.constant 0 : i32
    %50 = vector.broadcast %c0_i32_15 : i32 to vector<8x1xi32>
    %51 = arith.cmpi eq, %49, %50 : vector<8x1xi32>
    %cst_16 = arith.constant 0.000000e+00 : f32
    %52 = vector.broadcast %cst_16 : f32 to vector<8x1xf32>
    %53 = arith.select %51, %26, %52 : vector<8x1xi1>, vector<8x1xf32>
    %54 = vector.shape_cast %53 : vector<8x1xf32> to vector<1x8x1xf32>
    %cst_17 = arith.constant dense<0.000000e+00> : vector<1xf32>
    %55 = vector.multi_reduction <add>, %54, %cst_17 [1, 2] : vector<1x8x1xf32> to vector<1xf32>
    %56 = vector.shape_cast %55 : vector<1xf32> to vector<1x1x1xf32>
    %57 = vector.extract %56[0, 0, 0] : f32 from vector<1x1x1xf32>
    %cst_18 = arith.constant 0.000000e+00 : f32
    %58 = vector.broadcast %cst_18 : f32 to vector<8x1xf32>
    %59 = arith.select %51, %28, %58 : vector<8x1xi1>, vector<8x1xf32>
    %60 = vector.shape_cast %59 : vector<8x1xf32> to vector<1x8x1xf32>
    %cst_19 = arith.constant dense<0.000000e+00> : vector<1xf32>
    %61 = vector.multi_reduction <add>, %60, %cst_19 [1, 2] : vector<1x8x1xf32> to vector<1xf32>
    %62 = vector.shape_cast %61 : vector<1xf32> to vector<1x1x1xf32>
    %63 = vector.extract %62[0, 0, 0] : f32 from vector<1x1x1xf32>
    %cst_20 = arith.constant 0.000000e+00 : f32
    %64 = vector.broadcast %cst_20 : f32 to vector<8x1xf32>
    %65 = arith.select %51, %30, %64 : vector<8x1xi1>, vector<8x1xf32>
    %66 = vector.shape_cast %65 : vector<8x1xf32> to vector<1x8x1xf32>
    %cst_21 = arith.constant dense<0.000000e+00> : vector<1xf32>
    %67 = vector.multi_reduction <add>, %66, %cst_21 [1, 2] : vector<1x8x1xf32> to vector<1xf32>
    %68 = vector.shape_cast %67 : vector<1xf32> to vector<1x1x1xf32>
    %69 = vector.extract %68[0, 0, 0] : f32 from vector<1x1x1xf32>
    %70 = tpu.iota {dimensions = array<i32: 1>} : vector<8x128xi32>
    %cst_22 = arith.constant 0.000000e+00 : f32
    %71 = vector.broadcast %cst_22 : f32 to vector<8x128xf32>
    %c0_i32_23 = arith.constant 0 : i32
    %72 = vector.broadcast %c0_i32_23 : i32 to vector<8x128xi32>
    %73 = arith.cmpi eq, %70, %72 : vector<8x128xi32>
    %74 = vector.broadcast %23 : f32 to vector<8x128xf32>
    %75 = arith.select %73, %74, %71 : vector<8x128xi1>, vector<8x128xf32>
    %c1_i32_24 = arith.constant 1 : i32
    %76 = vector.broadcast %c1_i32_24 : i32 to vector<8x128xi32>
    %77 = arith.cmpi eq, %70, %76 : vector<8x128xi32>
    %78 = vector.broadcast %57 : f32 to vector<8x128xf32>
    %79 = arith.select %77, %78, %75 : vector<8x128xi1>, vector<8x128xf32>
    %c2_i32 = arith.constant 2 : i32
    %80 = vector.broadcast %c2_i32 : i32 to vector<8x128xi32>
    %81 = arith.cmpi eq, %70, %80 : vector<8x128xi32>
    %82 = vector.broadcast %63 : f32 to vector<8x128xf32>
    %83 = arith.select %81, %82, %79 : vector<8x128xi1>, vector<8x128xf32>
    %c3_i32 = arith.constant 3 : i32
    %84 = vector.broadcast %c3_i32 : i32 to vector<8x128xi32>
    %85 = arith.cmpi eq, %70, %84 : vector<8x128xi32>
    %86 = vector.broadcast %69 : f32 to vector<8x128xf32>
    %87 = arith.select %85, %86, %83 : vector<8x128xi1>, vector<8x128xf32>
    %c0_25 = arith.constant 0 : index
    %c0_26 = arith.constant 0 : index
    %c0_27 = arith.constant 0 : index
    %c0_28 = arith.constant 0 : index
    %88 = vector.load %arg4[%c0_25, %c0_26, %c0_27, %c0_28] : memref<1x1x8x128xf32, #tpu.memory_space<vmem>>, vector<1x1x8x128xf32>
    %89 = vector.shape_cast %88 : vector<1x1x8x128xf32> to vector<8x128xf32>
    %90 = vector.shape_cast %87 : vector<8x128xf32> to vector<1x1x8x128xf32>
    tpu.vector_store %arg4[%c0_25, %c0_26, %c0_27, %c0_28], %90 {strides = array<i32>} : memref<1x1x8x128xf32, #tpu.memory_space<vmem>>, vector<1x1x8x128xf32>,
    return
  }
  func.func @transform_0(%arg0: i32, %arg1: i32) -> (i32, i32) {
    %c0_i32 = arith.constant 0 : i32
    return %arg0, %arg1 : i32, i32
  }
  func.func @transform_1(%arg0: i32, %arg1: i32) -> (i32, i32) {
    %c0_i32 = arith.constant 0 : i32
    return %arg0, %arg1 : i32, i32
  }
  func.func @transform_2(%arg0: i32, %arg1: i32) -> (i32, i32, i32, i32) {
    %c0_i32 = arith.constant 0 : i32
    %c0_i32_0 = arith.constant 0 : i32
    %c0_i32_1 = arith.constant 0 : i32
    return %arg0, %arg1, %c0_i32, %c0_i32_0 : i32, i32, i32, i32
  }
}

</mosaic_0001>

<llo_original>
// kernel: tpu_custom_call.1
$region0: #{tpu_custom_call.1}
  #allocation0 [shape = 'u32[]', space=smem, size = 0x4, offset = 0x4, fixed_abs, tag = 'smem constant byte address 0x4 - core index']
  #allocation1 [shape = 'u32[144,128]{1,0:T(1,128)}', space=vmem, size = 0x12000, scoped, tag = 'internal scratch']
  %s0 = inlined_call_operand.hbm [shape: f32[8,256], index: 0, kind: input, shape index: {}]
  %s1 = inlined_call_operand.hbm [shape: f32[8,256], index: 1, kind: input, shape index: {}]
  %s2 = inlined_call_operand.hbm [shape: f32[1,2,8,128], index: 2, kind: output, shape index: {}]
  %s3 = sld [smem:[#allocation0]]
  $region49: #{tpu_custom_call.1} parent=0
    _
  %s5 = ssub.s32 1, %s3
  %s6 = scalar_select 0, %s5, %s3
  $region1: #{tpu_custom_call.1} parent=0
    #allocation2 [shape = 'u8[8192]{0}', space=vmem, size = 0x2000, scoped, tag = 'input window, operand 0']
    #allocation3 [shape = 's32[2]{0}', space=sflag, size = 0x8, scoped, tag = 'scoped memory for tpu_custom_call.1']
    #allocation4 [shape = 's32[2]{0}', space=sflag, size = 0x8, scoped, tag = 'scoped memory for tpu_custom_call.1']
    #allocation5 [shape = 'u8[8192]{0}', space=vmem, size = 0x2000, scoped, tag = 'input window, operand 1']
    #allocation6 [shape = 's32[2]{0}', space=sflag, size = 0x8, scoped, tag = 'scoped memory for tpu_custom_call.1']
    #allocation7 [shape = 'u8[8192]{0}', space=vmem, size = 0x2000, scoped, tag = 'output window, operand 0']
    %7 = vsyncpa [#allocation3], 0
    %s8 = scalar_lea.sflag [#allocation3], 1
    %9 = vsyncpa %s8, 0
    %10 = vsyncpa [#allocation6], 0
    %s11 = scalar_lea.sflag [#allocation6], 1
    %12 = vsyncpa %s11, 0
    %13 = vsyncpa [#allocation4], 0
    %s14 = scalar_lea.sflag [#allocation4], 1
    %15 = vsyncpa %s14, 0
    loop: start=0, step=1, limit=4
    $region2: #{tpu_custom_call.1} parent=1 // loop_pre_header
      _
    $region3: #{tpu_custom_call.1} parent=1 // loop_header
      %s17 = sphi 0, %s21
      %p18 = scmp.ge.s32.totalorder %s17, 4
      %s24 = sphi 0, %s36
      %s25 = sphi 0, %s32
      %s26 = sphi 0, %s24
      %s27 = sphi 0, %s25
      %s28 = sphi 0, %s26
      %s29 = sphi 0, %s27
      %s41 = sphi 0, %s43
      %s44 = sphi 0, %s41
      %s45 = sphi 0, %s44
      %s61 = sphi 0, %s45
      %s69 = sphi 0, %s71
      %s72 = sphi 0, %s69
      %s73 = sphi 0, %s72
      %s89 = sphi 0, %s73
      %s97 = sphi 0, %s99
      %s100 = sphi 0, %s97
      %s101 = sphi 0, %s100
      %s117 = sphi 0, %s101
    $region4: #{tpu_custom_call.1} parent=1 // loop_header_branch
      %20 = sbr.rel (%p18) target = $region8
    $region5: #{tpu_custom_call.1} parent=1 // loop_body
      %s22 = ssub.s32 %s17, 1
      %s23 = ssub.s32 %s17, 2
      %s30 = sadd.s32 1, %s25
      %p31 = scmp.ge.s32.totalorder %s30, 2
      %s32 = scalar_select %p31, 0, %s30
      %s33 = sadd.s32 1, %s24
      %s34 = scalar_select %p31, %s33, %s24
      %p35 = scmp.ge.s32.totalorder %s34, 1
      %s36 = scalar_select %p35, 0, %s34
      %s37 = ssub.s32 %s24, %s36
      %s38 = ssub.s32 %s25, %s32
      %s39 = sor.u32 %s37, %s38
      %p40 = scmp.eq.s32.totalorder %s39, 0
      %s42 = sadd.s32 %s41, 1
      %s43 = scalar_select %p40, %s41, %s42
      %p46 = pneg %p40
      %p47 = scmp.eq.s32.totalorder %s17, 1
      %p48 = por %p46, %p47
      %p49 = scmp.ne.s32.totalorder %s41, %s44
      %p50 = scmp.eq.s32.totalorder %s17, 0
      %p51 = por %p49, %p50
      %p52 = scmp.ne.s32.totalorder %s41, %s44
      %p53 = scmp.eq.s32.totalorder %s22, 1
      %p54 = por %p52, %p53
      %p55 = scmp.ne.s32.totalorder %s44, %s45
      %p56 = scmp.eq.s32.totalorder %s22, 0
      %p57 = por %p55, %p56
      %p58 = scmp.ne.s32.totalorder %s44, %s45
      %p59 = scmp.eq.s32.totalorder %s23, 1
      %p60 = por %p58, %p59
      %p62 = scmp.ne.s32.totalorder %s45, %s61
      %p63 = scmp.eq.s32.totalorder %s23, 0
      %p64 = por %p62, %p63
      %s65 = ssub.s32 %s24, %s36
      %s66 = ssub.s32 %s25, %s32
      %s67 = sor.u32 %s65, %s66
      %p68 = scmp.eq.s32.totalorder %s67, 0
      %s70 = sadd.s32 %s69, 1
      %s71 = scalar_select %p68, %s69, %s70
      %p74 = pneg %p68
      %p75 = scmp.eq.s32.totalorder %s17, 1
      %p76 = por %p74, %p75
      %p77 = scmp.ne.s32.totalorder %s69, %s72
      %p78 = scmp.eq.s32.totalorder %s17, 0
      %p79 = por %p77, %p78
      %p80 = scmp.ne.s32.totalorder %s69, %s72
      %p81 = scmp.eq.s32.totalorder %s22, 1
      %p82 = por %p80, %p81
      %p83 = scmp.ne.s32.totalorder %s72, %s73
      %p84 = scmp.eq.s32.totalorder %s22, 0
      %p85 = por %p83, %p84
      %p86 = scmp.ne.s32.totalorder %s72, %s73
      %p87 = scmp.eq.s32.totalorder %s23, 1
      %p88 = por %p86, %p87
      %p90 = scmp.ne.s32.totalorder %s73, %s89
      %p91 = scmp.eq.s32.totalorder %s23, 0
      %p92 = por %p90, %p91
      %s93 = ssub.s32 %s24, %s36
      %s94 = ssub.s32 %s25, %s32
      %s95 = sor.u32 %s93, %s94
      %p96 = scmp.eq.s32.totalorder %s95, 0
      %s98 = sadd.s32 %s97, 1
      %s99 = scalar_select %p96, %s97, %s98
      %p102 = pneg %p96
      %p103 = scmp.eq.s32.totalorder %s17, 1
      %p104 = por %p102, %p103
      %p105 = scmp.ne.s32.totalorder %s97, %s100
      %p106 = scmp.eq.s32.totalorder %s17, 0
      %p107 = por %p105, %p106
      %p108 = scmp.ne.s32.totalorder %s97, %s100
      %p109 = scmp.eq.s32.totalorder %s22, 1
      %p110 = por %p108, %p109
      %p111 = scmp.ne.s32.totalorder %s100, %s101
      %p112 = scmp.eq.s32.totalorder %s22, 0
      %p113 = por %p111, %p112
      %p114 = scmp.ne.s32.totalorder %s100, %s101
      %p115 = scmp.eq.s32.totalorder %s23, 1
      %p116 = por %p114, %p115
      %p118 = scmp.ne.s32.totalorder %s101, %s117
      %p119 = scmp.eq.s32.totalorder %s23, 0
      %p120 = por %p118, %p119
      %p121 = scmp.le.s32.totalorder 1, %s17
      %p122 = scmp.lt.s32.totalorder %s17, 3
      %p123 = pnand %p121, %p122
      %p124 = pneg %p123
      // Predicated region
      $region9: #{tpu_custom_call.1} parent=5 // pred_check
        _
      $region10: #{tpu_custom_call.1} parent=5 // pred_check_branch
        %126 = sbr.rel (%p123) target = $region12
      $region11: #{tpu_custom_call.1} parent=5 // pred_region
        %s127 = ssub.s32 %s17, 1
      $region12: #{tpu_custom_call.1} parent=5 // pred_fallthru
        _
      %p128 = scmp.lt.s32.totalorder %s17, 2
      // Predicated region
      $region13: #{tpu_custom_call.1} parent=5 // pred_check
        %p129 = pneg %p128
      $region14: #{tpu_custom_call.1} parent=5 // pred_check_branch
        %131 = sbr.rel (%p129) target = $region16
      $region15: #{tpu_custom_call.1} parent=5 // pred_region
        // Predicated region
        $region17: #{tpu_custom_call.1} parent=15 // pred_check
          %p132 = pneg %p51
        $region18: #{tpu_custom_call.1} parent=15 // pred_check_branch
          %134 = sbr.rel (%p132) target = $region20
        $region19: #{tpu_custom_call.1} parent=15 // pred_region
          %s135 = sand.u32 %s41, 1
          %s136 = scalar_lea.sflag [#allocation3], %s135
          %s137 = sand.u32 %s41, 1
          %s138 = smul.addr %s137, 8
          %s139 = scalar_lea.vmem [#allocation2], %s138
          %s141 = ssub.s32 128, 128
          %142 = vsyncadd %s136, %s141
          %s143 = smul.addr %s24, 2
          %s144 = sadd.s32 %s25, %s143
          %s145 = smul.addr %s144, 128
          %s146 = scalar_lea.hbm %s0, %s145
          %s148 = sshll.u32 %s139, 4
          %s149 = int_to_ptr.vmem [resolvable:$true] %s148
          %151 = dma.hbm_to_vmem [thread:$0]  %s146, 128, %s149, %s136
        $region20: #{tpu_custom_call.1} parent=15 // pred_fallthru
          _
        // Predicated region
        $region21: #{tpu_custom_call.1} parent=15 // pred_check
          %p152 = pneg %p79
        $region22: #{tpu_custom_call.1} parent=15 // pred_check_branch
          %154 = sbr.rel (%p152) target = $region24
        $region23: #{tpu_custom_call.1} parent=15 // pred_region
          %s155 = sand.u32 %s69, 1
          %s156 = scalar_lea.sflag [#allocation6], %s155
          %s157 = sand.u32 %s69, 1
          %s158 = smul.addr %s157, 8
          %s159 = scalar_lea.vmem [#allocation5], %s158
          %s161 = ssub.s32 128, 128
          %162 = vsyncadd %s156, %s161
          %s163 = smul.addr %s24, 2
          %s164 = sadd.s32 %s25, %s163
          %s165 = smul.addr %s164, 128
          %s166 = scalar_lea.hbm %s1, %s165
          %s168 = sshll.u32 %s159, 4
          %s169 = int_to_ptr.vmem [resolvable:$true] %s168
          %171 = dma.hbm_to_vmem [thread:$0]  %s166, 128, %s169, %s156
        $region24: #{tpu_custom_call.1} parent=15 // pred_fallthru
          _
      $region16: #{tpu_custom_call.1} parent=5 // pred_fallthru
        _
      %p172 = scmp.le.s32.totalorder 1, %s17
      %p173 = scmp.lt.s32.totalorder %s17, 3
      %p174 = pnand %p172, %p173
      %p175 = pneg %p174
      // Predicated region
      $region25: #{tpu_custom_call.1} parent=5 // pred_check
        _
      $region26: #{tpu_custom_call.1} parent=5 // pred_check_branch
        %177 = sbr.rel (%p174) target = $region28
      $region27: #{tpu_custom_call.1} parent=5 // pred_region
        %s178 = ssub.s32 %s17, 1
        %s179 = sand.u32 %s44, 1
        %s180 = scalar_lea.sflag [#allocation3], %s179
        %s181 = sand.u32 %s44, 1
        %s182 = smul.addr %s181, 8
        %s183 = scalar_lea.vmem [#allocation2], %s182
        // Predicated region
        $region29: #{tpu_custom_call.1} parent=27 // pred_check
          %p184 = pneg %p57
        $region30: #{tpu_custom_call.1} parent=27 // pred_check_branch
          %186 = sbr.rel (%p184) target = $region32
        $region31: #{tpu_custom_call.1} parent=27 // pred_region
          %187 = dma.done %s180, 128
        $region32: #{tpu_custom_call.1} parent=27 // pred_fallthru
          _
        %s188 = sand.u32 %s72, 1
        %s189 = scalar_lea.sflag [#allocation6], %s188
        %s190 = sand.u32 %s72, 1
        %s191 = smul.addr %s190, 8
        %s192 = scalar_lea.vmem [#allocation5], %s191
        // Predicated region
        $region33: #{tpu_custom_call.1} parent=27 // pred_check
          %p193 = pneg %p85
        $region34: #{tpu_custom_call.1} parent=27 // pred_check_branch
          %195 = sbr.rel (%p193) target = $region36
        $region35: #{tpu_custom_call.1} parent=27 // pred_region
          %196 = dma.done %s189, 128
        $region36: #{tpu_custom_call.1} parent=27 // pred_fallthru
          _
        %s197 = sand.u32 %s44, 1
        %s198 = scalar_lea.sflag [#allocation3], %s197
        %s199 = sand.u32 %s44, 1
        %s200 = smul.addr %s199, 8
        %s201 = scalar_lea.vmem [#allocation2], %s200
        %p202 = pneg %p57
        %p203 = pneg %p54
        %s204 = sand.u32 %s72, 1
        %s205 = scalar_lea.sflag [#allocation6], %s204
        %s206 = sand.u32 %s72, 1
        %s207 = smul.addr %s206, 8
        %s208 = scalar_lea.vmem [#allocation5], %s207
        %p209 = pneg %p85
        %p210 = pneg %p82
        %p211 = pneg %p113
        %p212 = pneg %p110
        %s213 = sand.u32 %s100, 1
        %s214 = scalar_lea.sflag [#allocation4], %s213
        %s215 = sand.u32 %s100, 1
        %s216 = smul.addr %s215, 8
        %s217 = scalar_lea.vmem [#allocation7], %s216
        %v218 = vld [vmem:[%s183] sm:$0xff]
        %v219 = vld [vmem:[%s192] sm:$0xff]
        %s220 = smul.u32 %s26, 8
        %v221 = vlog2.pop %v218
        %v222 = vmul.f32 %v221, 0.6931472
        %v223 = vmax.f32 %v222, -100.0
        %v224 = vmul.f32 %v219, %v223
        %v225 = vsub.f32 1.0, %v219
        %v226 = vsub.f32 1.0, %v218
        %v227 = vlog2.pop %v226
        %v228 = vmul.f32 %v227, 0.6931472
        %v229 = vmax.f32 %v228, -100.0
        %v230 = vmul.f32 %v225, %v229
        %v231 = vadd.f32 %v224, %v230
        %v232 = vsub.f32 0.0, %v231
        %233 = vadd.xlane.f32.xlu0 %v232
        %v234 = vpop.xlane.xlu0 %233
        %vm235 = vcmask 7168
        %v236 = vsel %vm235, %v234, 0.0
        %237 = vadd.xlane.f32.xlu0 %v236
        %v238 = vpop.xlane.xlu0 %237
        %v239 = vrot.slane %v238, 4
        %v240 = vadd.f32 %v238, %v239
        %v241 = vrot.slane %v240, 2
        %v242 = vadd.f32 %v240, %v241
        %v243 = vrot.slane %v242, 1
        %v244 = vadd.f32 %v242, %v243
        %s245 = vtos %v244
        %v246 = vmul.f32 %v218, %v219
        %247 = vadd.xlane.f32.xlu0 %v246
        %v248 = vpop.xlane.xlu0 %247
        %249 = vadd.xlane.f32.xlu0 %v218
        %v250 = vpop.xlane.xlu0 %249
        %251 = vadd.xlane.f32.xlu0 %v219
        %v252 = vpop.xlane.xlu0 %251
        %v253 = vlaneseq
        %v254 = vshrl.u32 %v253, 7
        %v255 = vstv %s220
        %v256 = vadd.s32 %v255, %v254
        %vm257 = vcmp.lt.s32.totalorder %v256, 0
        %v258 = vsub.s32 0, %v256
        %v259 = vsel %vm257, %v258, %v256
        %v260 = vshrl.u32 %v259, 2
        %v261 = vand.u32 %v259, 3
        %v262 = vsub.s32 0, %v261
        %v263 = vsel %vm257, %v262, %v261
        %vm264 = vcmp.ne.s32.totalorder %v263, 0
        %vm265 = vcmp.lt.s32.totalorder %v263, 0
        %vm266 = vmand %vm265, %vm264
        %v267 = vadd.s32 %v263, 4
        %v268 = vsel %vm266, %v267, %v263
        %vm269 = vcmp.eq.s32.totalorder %v268, 0
        %v270 = vsel %vm269, %v248, 0.0
        %v271 = vsel %vm235, %v270, 0.0
        %272 = vadd.xlane.f32.xlu0 %v271
        %v273 = vpop.xlane.xlu0 %272
        %v274 = vrot.slane %v273, 4
        %v275 = vadd.f32 %v273, %v274
        %v276 = vrot.slane %v275, 2
        %v277 = vadd.f32 %v275, %v276
        %v278 = vrot.slane %v277, 1
        %v279 = vadd.f32 %v277, %v278
        %s280 = vtos %v279
        %v281 = vsel %vm269, %v250, 0.0
        %v282 = vsel %vm235, %v281, 0.0
        %283 = vadd.xlane.f32.xlu0 %v282
        %v284 = vpop.xlane.xlu0 %283
        %v285 = vrot.slane %v284, 4
        %v286 = vadd.f32 %v284, %v285
        %v287 = vrot.slane %v286, 2
        %v288 = vadd.f32 %v286, %v287
        %v289 = vrot.slane %v288, 1
        %v290 = vadd.f32 %v288, %v289
        %s291 = vtos %v290
        %v292 = vsel %vm269, %v252, 0.0
        %v293 = vsel %vm235, %v292, 0.0
        %294 = vadd.xlane.f32.xlu0 %v293
        %v295 = vpop.xlane.xlu0 %294
        %v296 = vrot.slane %v295, 4
        %v297 = vadd.f32 %v295, %v296
        %v298 = vrot.slane %v297, 2
        %v299 = vadd.f32 %v297, %v298
        %v300 = vrot.slane %v299, 1
        %v301 = vadd.f32 %v299, %v300
        %s302 = vtos %v301
        %v303 = vlaneseq
        %v304 = vand.u32 %v303, 127
        %vm305 = vcmp.eq.s32.totalorder %v304, 0
        %v306 = vstv %s245
        %v307 = vsel %vm305, %v306, 0.0
        %vm308 = vcmp.eq.s32.totalorder %v304, 1
        %v309 = vstv %s280
        %v310 = vsel %vm308, %v309, %v307
        %vm311 = vcmp.eq.s32.totalorder %v304, 2
        %v312 = vstv %s291
        %v313 = vsel %vm311, %v312, %v310
        %vm314 = vcmp.eq.s32.totalorder %v304, 3
        %v315 = vstv %s302
        %v316 = vsel %vm314, %v315, %v313
        %317 = vst [vmem:[%s217] sm:$0xff] %v316
        %s318 = sand.u32 %s100, 1
        %s319 = scalar_lea.sflag [#allocation4], %s318
        %s320 = sand.u32 %s100, 1
        %s321 = smul.addr %s320, 8
        %s322 = scalar_lea.vmem [#allocation7], %s321
        // Predicated region
        $region37: #{tpu_custom_call.1} parent=27 // pred_check
          %p323 = pneg %p110
        $region38: #{tpu_custom_call.1} parent=27 // pred_check_branch
          %325 = sbr.rel (%p323) target = $region40
        $region39: #{tpu_custom_call.1} parent=27 // pred_region
          %s327 = ssub.s32 128, 128
          %328 = vsyncadd %s319, %s327
          %s329 = smul.addr %s26, 2
          %s330 = sadd.s32 %s27, %s329
          %s331 = smul.addr %s330, 128
          %s332 = scalar_lea.hbm %s2, %s331
          %s334 = sshll.u32 %s322, 4
          %s335 = int_to_ptr.vmem [resolvable:$true] %s334
          %337 = dma.vmem_to_hbm [thread:$0]  %s335, 128, %s332, %s319
        $region40: #{tpu_custom_call.1} parent=27 // pred_fallthru
          _
      $region28: #{tpu_custom_call.1} parent=5 // pred_fallthru
        _
      %p338 = scmp.le.s32.totalorder 2, %s17
      // Predicated region
      $region41: #{tpu_custom_call.1} parent=5 // pred_check
        %p339 = pneg %p338
      $region42: #{tpu_custom_call.1} parent=5 // pred_check_branch
        %341 = sbr.rel (%p339) target = $region44
      $region43: #{tpu_custom_call.1} parent=5 // pred_region
        %s342 = ssub.s32 %s17, 2
        // Predicated region
        $region45: #{tpu_custom_call.1} parent=43 // pred_check
          %p343 = pneg %p116
        $region46: #{tpu_custom_call.1} parent=43 // pred_check_branch
          %345 = sbr.rel (%p343) target = $region48
        $region47: #{tpu_custom_call.1} parent=43 // pred_region
          %s346 = sand.u32 %s101, 1
          %s347 = scalar_lea.sflag [#allocation4], %s346
          %s348 = sand.u32 %s101, 1
          %s349 = smul.addr %s348, 8
          %s350 = scalar_lea.vmem [#allocation7], %s349
          %351 = dma.done %s347, 128
        $region48: #{tpu_custom_call.1} parent=43 // pred_fallthru
          _
      $region44: #{tpu_custom_call.1} parent=5 // pred_fallthru
        _
    $region6: #{tpu_custom_call.1} parent=1 // loop_footer
      %s21 = sadd.s32 1, %s17
    $region7: #{tpu_custom_call.1} parent=1 // loop_footer_branch
      %16 = sbr.rel target = $region3
    $region8: #{tpu_custom_call.1} parent=1 // loop_exit
      _
    %352 = vsyncpa [#allocation3], 1
    %s353 = scalar_lea.sflag [#allocation3], 1
    %354 = vsyncpa %s353, 1
    %355 = vsyncpa [#allocation6], 1
    %s356 = scalar_lea.sflag [#allocation6], 1
    %357 = vsyncpa %s356, 1
    %358 = vsyncpa [#allocation4], 1
    %s359 = scalar_lea.sflag [#allocation4], 1
    %360 = vsyncpa %s359, 1

</llo_original>
